<compile_context>
chip_gen: v7x
topology: tpu7x:2x2x1
jax: 0.10.0
libtpu: 0.0.40
codegen_flags: <defaults>
</compile_context>

<pallas_src>
import functools
import math

import jax
import jax.numpy as jnp
from jax import lax
from jax.experimental import pallas as pl
from jax.experimental.pallas import tpu as pltpu

# Target output range (matches the torch module: self.min = 0, self.max = 1).
_OUT_MIN = 0.0
_OUT_MAX = 1.0

_LANE = 128
_MAX_COLS = 4096            # preferred lane width when we can freely re-factor
_MAX_BLOCK_COLS = 8192      # column-tile cap for the natural-shape fallback
_MAX_PARTIALS_IN_PASS2 = 64 # above this, fold partials in the wrapper instead


# --------------------------------------------------------------------------- #
# Hardware / shape helpers
# --------------------------------------------------------------------------- #
def _vmem_capacity_bytes() -> int:
    """Physical per-core VMEM; conservative (v7x) fallback if query fails."""
    try:
        info = pltpu.get_tpu_info()
        cap = getattr(info, "vmem_capacity_bytes", None)
        if cap:
            return int(cap)
    except Exception:
        pass
    return 64 * 1024 * 1024


def _default_budgets(cap: int):
    """(pass1_block_budget, pass2_block_budget, vmem_limit) in f32-equiv bytes."""
    if cap >= 96 * 1024 * 1024:                       # v5e / v6e (128 MiB VMEM)
        return 6 * 1024 * 1024, 3 * 1024 * 1024, 48 * 1024 * 1024
    return 3 * 1024 * 1024, 2 * 1024 * 1024, 28 * 1024 * 1024   # v7x (64 MiB)


def _row_packing(itemsize: int) -> int:
    """Sublane packing granularity: 8 (f32), 16 (bf16), 32 (int8/fp8)."""
    return max(8, 32 // max(1, itemsize))


def _choose_2d_shape(shape) -> tuple[int, int]:
    """Lane-dense (rows, cols) re-factorization of the flattened tensor."""
    total = math.prod(shape)
    if total % _LANE == 0:
        cols = _LANE
        while (cols * 2 <= _MAX_COLS and total % (cols * 2) == 0
               and total // (cols * 2) >= 8):
            cols *= 2
        return total // cols, cols
    # Odd totals: fall back to the natural (leading dims, H*W) split.
    if len(shape) >= 3:
        return math.prod(shape[:-2]), shape[-2] * shape[-1]
    if len(shape) == 2:
        return shape[0], shape[1]
    return 1, total


def _pick_block(extent: int, granularity: int, max_block: int) -> int:
    """Largest block <= max_block that is a multiple of `granularity`,
    or the full extent (always legal) when it already fits."""
    if extent <= max_block:
        return extent
    return max(granularity, (max_block // granularity) * granularity)


def _pick_block_rows(rows: int, block_cols: int, packing: int,
                     budget_f32_bytes: int) -> int:
    max_rows = max(packing, (budget_f32_bytes // 4) // max(1, block_cols))
    return _pick_block(rows, packing, max_rows)


# --------------------------------------------------------------------------- #
# Kernels
# --------------------------------------------------------------------------- #
def _fused_kernel(x_ref, o_ref):
    """Single-read path: reduce + rescale the whole tensor in one shot."""
    x = x_ref[...].astype(jnp.float32)
    # Sublane-first, then lane reduction (minimal XLU work).
    mn = jnp.min(jnp.min(x, axis=0, keepdims=True), axis=1, keepdims=True)
    mx = jnp.max(jnp.max(x, axis=0, keepdims=True), axis=1, keepdims=True)
    inv = 1.0 / (mx - mn)                  # matches torch (inf/NaN if constant)
    y = (x - mn) * inv
    if (_OUT_MAX - _OUT_MIN) != 1.0 or _OUT_MIN != 0.0:   # trace-time fold
        y = y * (_OUT_MAX - _OUT_MIN) + _OUT_MIN
    o_ref[...] = y.astype(o_ref.dtype)


def _minmax_partial_kernel(x_ref, min_ref, max_ref, *,
                           rows, cols, block_rows, block_cols):
    """Pass 1: per-row-tile running min/max over the column (reduction) axis.

    min_ref / max_ref are (1, 1, 1) accumulators resident across grid axis 1.
    Tail blocks (cdiv grids) are masked with iota vs. the true extents.
    """
    j = pl.program_id(1)

    @pl.when(j == 0)
    def _():
        min_ref[...] = jnp.full(min_ref.shape, jnp.inf, jnp.float32)
        max_ref[...] = jnp.full(max_ref.shape, -jnp.inf, jnp.float32)

    x = x_ref[...].astype(jnp.float32)

    need_row_mask = (rows % block_rows) != 0
    need_col_mask = (cols % block_cols) != 0
    if need_row_mask or need_col_mask:
        i = pl.program_id(0)
        valid = None
        if need_row_mask:
            row_ids = lax.broadcasted_iota(jnp.int32, x.shape, 0) + i * block_rows
            valid = row_ids < rows
        if need_col_mask:
            col_ids = lax.broadcasted_iota(jnp.int32, x.shape, 1) + j * block_cols
            cmask = col_ids < cols
            valid = cmask if valid is None else (valid & cmask)
        x_min = jnp.where(valid, x, jnp.inf)
        x_max = jnp.where(valid, x, -jnp.inf)
    else:
        x_min = x_max = x

    # Sublane-first reduction: bulk work on the VPU, only a few XLU ops per tile.
    t_min = jnp.min(jnp.min(x_min, axis=0, keepdims=True), axis=1, keepdims=True)
    t_max = jnp.max(jnp.max(x_max, axis=0, keepdims=True), axis=1, keepdims=True)
    min_ref[...] = jnp.minimum(min_ref[...], t_min[None])
    max_ref[...] = jnp.maximum(max_ref[...], t_max[None])


def _scale_kernel(min_ref, max_ref, x_ref, o_ref):
    """Pass 2: (x - min) * 1/(max - min), rescaled to [_OUT_MIN, _OUT_MAX].

    min_ref / max_ref hold the (P, 1, 1) pass-1 partials; reducing them here is
    a handful of ops per tile and avoids an extra XLA launch.
    Tail blocks need no masking: out-of-bounds stores are dropped by Pallas.
    """
    mn = jnp.min(min_ref[...])
    mx = jnp.max(max_ref[...])
    inv = 1.0 / (mx - mn)                  # matches torch (inf/NaN if constant)
    y = (x_ref[...].astype(jnp.float32) - mn) * inv
    if (_OUT_MAX - _OUT_MIN) != 1.0 or _OUT_MIN != 0.0:   # trace-time fold
        y = y * (_OUT_MAX - _OUT_MIN) + _OUT_MIN
    o_ref[...] = y.astype(o_ref.dtype)


# --------------------------------------------------------------------------- #
# Wrapper
# --------------------------------------------------------------------------- #
def min_max_scale(x: jax.Array, *, force_two_pass: bool = False,
                  _p1_block_bytes: int | None = None,
                  _p2_block_bytes: int | None = None,
                  _block_cols_cap: int | None = None) -> jax.Array:
    """Pallas equivalent of MinMaxScale.forward (global min-max normalization)."""
    assert x.ndim >= 1, "expected at least a 1-D input"
    orig_shape = x.shape
    rows, cols = _choose_2d_shape(orig_shape)
    x2 = x.reshape(rows, cols)
    total = rows * cols
    itemsize = x2.dtype.itemsize

    cap = _vmem_capacity_bytes()
    p1_budget, p2_budget, vmem_limit = _default_budgets(cap)
    if _p1_block_bytes is not None:
        p1_budget = _p1_block_bytes
    if _p2_block_bytes is not None:
        p2_budget = _p2_block_bytes
    cols_cap = _block_cols_cap if _block_cols_cap is not None else _MAX_BLOCK_COLS

    # ---------------- Fused single-read path (tensor resident in VMEM) -------
    fused_budget = min(cap // 2, 48 * 1024 * 1024)
    fused_footprint = total * (4 * itemsize + 4)   # 2x in + 2x out + f32 copy
    if fused_footprint <= fused_budget and not force_two_pass:
        y2 = pl.pallas_call(
            _fused_kernel,
            out_shape=jax.ShapeDtypeStruct((rows, cols), x.dtype),
            grid_spec=pltpu.PrefetchScalarGridSpec(
                num_scalar_prefetch=0,
                grid=(1,),
                in_specs=[pl.BlockSpec((rows, cols), lambda i: (0, 0))],
                out_specs=pl.BlockSpec((rows, cols), lambda i: (0, 0)),
            ),
            compiler_params=pltpu.CompilerParams(
                dimension_semantics=("arbitrary",),
                vmem_limit_bytes=min((3 * cap) // 4, fused_budget + (16 << 20)),
            ),
        )(x2)
        return y2.reshape(orig_shape)

    # ---------------- Two-pass streaming path --------------------------------
    packing = _row_packing(itemsize)
    block_cols = _pick_block(cols, _LANE, cols_cap)
    n_col = pl.cdiv(cols, block_cols)

    # Pass 1: only the input streams (accumulators are resident) -> bigger rows.
    br1 = _pick_block_rows(rows, block_cols, packing, p1_budget)
    n_row1 = pl.cdiv(rows, br1)

    kernel1 = functools.partial(_minmax_partial_kernel, rows=rows, cols=cols,
                                block_rows=br1, block_cols=block_cols)
    mn_p, mx_p = pl.pallas_call(
        kernel1,
        out_shape=(jax.ShapeDtypeStruct((n_row1, 1, 1), jnp.float32),
                   jax.ShapeDtypeStruct((n_row1, 1, 1), jnp.float32)),
        grid_spec=pltpu.PrefetchScalarGridSpec(
            num_scalar_prefetch=0,
            grid=(n_row1, n_col),
            in_specs=[pl.BlockSpec((br1, block_cols), lambda i, j: (i, j))],
            out_specs=(pl.BlockSpec((1, 1, 1), lambda i, j: (i, 0, 0)),
                       pl.BlockSpec((1, 1, 1), lambda i, j: (i, 0, 0))),
        ),
        compiler_params=pltpu.CompilerParams(
            dimension_semantics=("parallel", "arbitrary"),   # v7x megacore on rows
            vmem_limit_bytes=vmem_limit,
        ),
    )(x2)

    # Too many partials -> fold them with a tiny XLA reduce before pass 2.
    if n_row1 > _MAX_PARTIALS_IN_PASS2:
        mn_p = jnp.min(mn_p).reshape(1, 1, 1)
        mx_p = jnp.max(mx_p).reshape(1, 1, 1)
    n_partials = mn_p.shape[0]

    # Pass 2: elementwise rescale, fully parallel (megacore-friendly).
    br2 = _pick_block_rows(rows, block_cols, packing, p2_budget)
    n_row2 = pl.cdiv(rows, br2)
    # TODO(synk): optionally expose input_output_aliases={2: 0} for callers that
    # can donate the input (halves peak HBM footprint; bandwidth unchanged).
    y2 = pl.pallas_call(
        _scale_kernel,
        out_shape=jax.ShapeDtypeStruct((rows, cols), x.dtype),
        grid_spec=pltpu.PrefetchScalarGridSpec(
            num_scalar_prefetch=0,
            grid=(n_row2, n_col),
            in_specs=[pl.BlockSpec((n_partials, 1, 1), lambda i, j: (0, 0, 0)),
                      pl.BlockSpec((n_partials, 1, 1), lambda i, j: (0, 0, 0)),
                      pl.BlockSpec((br2, block_cols), lambda i, j: (i, j))],
            out_specs=pl.BlockSpec((br2, block_cols), lambda i, j: (i, j)),
        ),
        compiler_params=pltpu.CompilerParams(
            dimension_semantics=("parallel", "parallel"),
            vmem_limit_bytes=vmem_limit,
        ),
    )(mn_p, mx_p, x2)

    return y2.reshape(orig_shape)


if __name__ == "__main__":
    key = jax.random.PRNGKey(0)
    k1, k2 = jax.random.split(key)

    # Demo shape (NCHW image batch) — exercises the fused single-read path.
    x = jax.random.normal(k1, (2, 4, 16, 16), dtype=jnp.float32)
    out = jax.block_until_ready(min_max_scale(x))
    ref = (x - x.min()) / (x.max() - x.min())
    assert out.shape == x.shape and out.dtype == x.dtype
    assert jnp.allclose(out, ref, atol=1e-5, rtol=1e-5), float(
        jnp.max(jnp.abs(out - ref)))

    # Exercise the tiled two-pass path (cdiv grids, masked row/col tails,
    # per-row-tile partial accumulators) with tiny forced block sizes.
    x2 = jax.random.normal(k2, (5, 3, 20, 36), dtype=jnp.float32)
    out2 = jax.block_until_ready(
        min_max_scale(x2, force_two_pass=True,
                      _p1_block_bytes=8 * 1024, _p2_block_bytes=8 * 1024,
                      _block_cols_cap=256))
    ref2 = (x2 - x2.min()) / (x2.max() - x2.min())
    assert out2.shape == x2.shape and out2.dtype == x2.dtype
    assert jnp.allclose(out2, ref2, atol=1e-5, rtol=1e-5), float(
        jnp.max(jnp.abs(out2 - ref2)))

    print("KERNEL_OK")
</pallas_src>

<mosaic_0001>
module attributes {stable_mosaic.version = 11 : i64} {
  func.func @_fused_kernel(%arg0: i32, %arg1: memref<8x256xf32, #tpu.memory_space<vmem>>, %arg2: memref<8x256xf32, #tpu.memory_space<vmem>>) attributes {dimension_semantics = [#tpu.dimension_semantics<arbitrary>], iteration_bounds = array<i64: 1>, scalar_prefetch = 0 : i64, scratch_operands = 0 : i64, tpu.core_type = #tpu.core_type<tc>, window_params = [{pipeline_mode = #tpu.pipeline_mode<synchronous>, transform_indices = @transform_0, window_bounds = array<i64: 8, 256>}, {pipeline_mode = #tpu.pipeline_mode<synchronous>, transform_indices = @transform_1, window_bounds = array<i64: 8, 256>}]} {
    %c0 = arith.constant 0 : index
    %c0_0 = arith.constant 0 : index
    %0 = vector.load %arg1[%c0, %c0_0] : memref<8x256xf32, #tpu.memory_space<vmem>>, vector<8x256xf32>
    %cst = arith.constant dense<0x7F800000> : vector<256xf32>
    %1 = vector.multi_reduction <minimumf>, %0, %cst [0] : vector<8x256xf32> to vector<256xf32>
    %2 = vector.shape_cast %1 : vector<256xf32> to vector<1x256xf32>
    %cst_1 = arith.constant dense<0x7F800000> : vector<1xf32>
    %3 = vector.multi_reduction <minimumf>, %2, %cst_1 [1] : vector<1x256xf32> to vector<1xf32>
    %4 = vector.shape_cast %3 : vector<1xf32> to vector<1x1xf32>
    %cst_2 = arith.constant dense<0xFF800000> : vector<256xf32>
    %5 = vector.multi_reduction <maximumf>, %0, %cst_2 [0] : vector<8x256xf32> to vector<256xf32>
    %6 = vector.shape_cast %5 : vector<256xf32> to vector<1x256xf32>
    %cst_3 = arith.constant dense<0xFF800000> : vector<1xf32>
    %7 = vector.multi_reduction <maximumf>, %6, %cst_3 [1] : vector<1x256xf32> to vector<1xf32>
    %8 = vector.shape_cast %7 : vector<1xf32> to vector<1x1xf32>
    %9 = arith.subf %8, %4 : vector<1x1xf32>
    %cst_4 = arith.constant 1.000000e+00 : f32
    %10 = vector.broadcast %cst_4 : f32 to vector<1x1xf32>
    %11 = arith.divf %10, %9 : vector<1x1xf32>
    %12 = vector.broadcast %4 : vector<1x1xf32> to vector<8x256xf32>
    %13 = arith.subf %0, %12 : vector<8x256xf32>
    %14 = vector.broadcast %11 : vector<1x1xf32> to vector<8x256xf32>
    %15 = arith.mulf %13, %14 : vector<8x256xf32>
    %c0_5 = arith.constant 0 : index
    %c0_6 = arith.constant 0 : index
    %16 = vector.load %arg2[%c0_5, %c0_6] : memref<8x256xf32, #tpu.memory_space<vmem>>, vector<8x256xf32>
    tpu.vector_store %arg2[%c0_5, %c0_6], %15 {strides = array<i32>} : memref<8x256xf32, #tpu.memory_space<vmem>>, vector<8x256xf32>,
    return
  }
  func.func @transform_0(%arg0: i32) -> (i32, i32) {
    %c0_i32 = arith.constant 0 : i32
    %c0_i32_0 = arith.constant 0 : i32
    %c0_i32_1 = arith.constant 0 : i32
    return %c0_i32, %c0_i32_0 : i32, i32
  }
  func.func @transform_1(%arg0: i32) -> (i32, i32) {
    %c0_i32 = arith.constant 0 : i32
    %c0_i32_0 = arith.constant 0 : i32
    %c0_i32_1 = arith.constant 0 : i32
    return %c0_i32, %c0_i32_0 : i32, i32
  }
}

</mosaic_0001>

<llo_original>
// kernel: tpu_custom_call.1
$region0: #{tpu_custom_call.1}
  #allocation0 [shape = 'u32[]', space=smem, size = 0x4, offset = 0x4, fixed_abs, tag = 'smem constant byte address 0x4 - core index']
  #allocation1 [shape = 'u32[144,128]{1,0:T(1,128)}', space=vmem, size = 0x12000, scoped, tag = 'internal scratch']
  %s0 = inlined_call_operand.hbm [shape: f32[8,256], index: 0, kind: input, shape index: {}]
  %s1 = inlined_call_operand.hbm [shape: f32[8,256], index: 1, kind: output, shape index: {}]
  %s2 = sld [smem:[#allocation0]]
  $region18: #{tpu_custom_call.1} parent=0
    _
  %s4 = ssub.s32 1, %s2
  %s5 = scalar_select 0, %s4, %s2
  $region1: #{tpu_custom_call.1} parent=0
    #allocation2 [shape = 'u8[8192]{0}', space=vmem, size = 0x2000, scoped, tag = 'input window, operand 0, single buffered']
    #allocation3 [shape = 's32[1]{0}', space=sflag, size = 0x4, scoped, tag = 'scoped memory for tpu_custom_call.1']
    #allocation4 [shape = 's32[1]{0}', space=sflag, size = 0x4, scoped, tag = 'scoped memory for tpu_custom_call.1']
    #allocation5 [shape = 'u8[8192]{0}', space=vmem, size = 0x2000, scoped, tag = 'output window, operand 0, single buffered']
    %6 = vsyncpa [#allocation3], 0
    %7 = vsyncpa [#allocation4], 0
    // Predicated region
    $region2: #{tpu_custom_call.1} parent=1 // pred_check
      _
    $region3: #{tpu_custom_call.1} parent=1 // pred_check_branch
      %9 = sbr.rel (0) target = $region5
    $region4: #{tpu_custom_call.1} parent=1 // pred_region
      %s11 = ssub.s32 256, 256
      %12 = vsyncadd [#allocation3], %s11
      %s14 = sshll.u32 [#allocation2], 4
      %s15 = int_to_ptr.vmem [resolvable:$true] %s14
      %17 = dma.hbm_to_vmem [thread:$0]  %s0, 256, %s15, [#allocation3]
    $region5: #{tpu_custom_call.1} parent=1 // pred_fallthru
      _
    // Predicated region
    $region6: #{tpu_custom_call.1} parent=1 // pred_check
      _
    $region7: #{tpu_custom_call.1} parent=1 // pred_check_branch
      %19 = sbr.rel (0) target = $region9
    $region8: #{tpu_custom_call.1} parent=1 // pred_region
      %20 = dma.done [#allocation3], 256
    $region9: #{tpu_custom_call.1} parent=1 // pred_fallthru
      _
    %v21 = vld [vmem:[#allocation2] sm:$0xff]
    %v22 = vld [vmem:[#allocation2 + $0x8] sm:$0xff]
    %v23 = vrot.slane %v21, 4
    %v24 = vmin.f32 %v21, %v23
    %v25 = vrot.slane %v24, 2
    %v26 = vmin.f32 %v24, %v25
    %v27 = vrot.slane %v26, 1
    %v28 = vmin.f32 %v26, %v27
    %v29 = vrot.slane %v22, 4
    %v30 = vmin.f32 %v22, %v29
    %v31 = vrot.slane %v30, 2
    %v32 = vmin.f32 %v30, %v31
    %v33 = vrot.slane %v32, 1
    %v34 = vmin.f32 %v32, %v33
    %v35 = vmin.f32 %v28, %v34
    %36 = vmin.xlane.f32.xlu0 %v35
    %v37 = vpop.xlane.xlu0 %36
    %v38 = vrot.slane %v21, 4
    %v39 = vmax.f32 %v21, %v38
    %v40 = vrot.slane %v39, 2
    %v41 = vmax.f32 %v39, %v40
    %v42 = vrot.slane %v41, 1
    %v43 = vmax.f32 %v41, %v42
    %v44 = vrot.slane %v22, 4
    %v45 = vmax.f32 %v22, %v44
    %v46 = vrot.slane %v45, 2
    %v47 = vmax.f32 %v45, %v46
    %v48 = vrot.slane %v47, 1
    %v49 = vmax.f32 %v47, %v48
    %v50 = vmax.f32 %v43, %v49
    %51 = vmax.xlane.f32.xlu0 %v50
    %v52 = vpop.xlane.xlu0 %51
    %v53 = vsub.f32 %v52, %v37
    %v54 = vrcp.pop %v53
    %v55 = vmul.f32 1.0, %v54
    %v56 = vsub.f32 %v21, %v37
    %v57 = vsub.f32 %v22, %v37
    %v58 = vmul.f32 %v56, %v55
    %v59 = vmul.f32 %v57, %v55
    %60 = vst [vmem:[#allocation5] sm:$0xff] %v58
    %61 = vst [vmem:[#allocation5 + $0x8] sm:$0xff] %v59
    // Predicated region
    $region10: #{tpu_custom_call.1} parent=1 // pred_check
      _
    $region11: #{tpu_custom_call.1} parent=1 // pred_check_branch
      %63 = sbr.rel (0) target = $region13
    $region12: #{tpu_custom_call.1} parent=1 // pred_region
      %s65 = ssub.s32 256, 256
      %66 = vsyncadd [#allocation4], %s65
      %s68 = sshll.u32 [#allocation5], 4
      %s69 = int_to_ptr.vmem [resolvable:$true] %s68
      %71 = dma.vmem_to_hbm [thread:$0]  %s69, 256, %s1, [#allocation4]
    $region13: #{tpu_custom_call.1} parent=1 // pred_fallthru
      _
    // Predicated region
    $region14: #{tpu_custom_call.1} parent=1 // pred_check
      _
    $region15: #{tpu_custom_call.1} parent=1 // pred_check_branch
      %73 = sbr.rel (0) target = $region17
    $region16: #{tpu_custom_call.1} parent=1 // pred_region
      %74 = dma.done [#allocation4], 256
    $region17: #{tpu_custom_call.1} parent=1 // pred_fallthru
      _
    %75 = vsyncpa [#allocation3], 1
    %76 = vsyncpa [#allocation4], 1

</llo_original>
